<compile_context>
chip_gen: v5e
topology: v5e:2x2
jax: 0.10.0
libtpu: 0.0.40
codegen_flags: <defaults>
</compile_context>

<pallas_src>
import functools

import jax
import jax.numpy as jnp
from jax.experimental import pallas as pl
from jax.experimental.pallas import tpu as pltpu


def _layernorm_kernel(x_ref, a_ref, b_ref, o_ref, *, eps, feat):
    # x_ref: (tm, F), a_ref/b_ref: (1, F) already float32.
    x = x_ref[...].astype(jnp.float32)

    # One-pass statistics: both reductions read x directly (overlapping XLU
    # work) instead of the second reduction waiting on the mean broadcast.
    s = jnp.sum(x, axis=-1, keepdims=True)
    sq = jnp.sum(x * x, axis=-1, keepdims=True)
    n = jnp.float32(feat)
    mean = s / n
    # unbiased variance (torch.Tensor.std default: ddof=1)
    var = (sq - s * mean) / jnp.float32(feat - 1)
    var = jnp.maximum(var, 0.0)           # guard cancellation -> tiny negative
    std = jnp.sqrt(var)

    # torch LayerNorm variant here divides by (std + eps), not sqrt(var + eps).
    inv = pl.reciprocal(std + jnp.float32(eps), approx=False)
    y = (x - mean) * inv * a_ref[...] + b_ref[...]
    o_ref[...] = y.astype(o_ref.dtype)


def _choose_tiling(n_rows, n_feat, itemsize, target_block_bytes=2 << 20,
                   min_grid=8):
    """Pick (tm, n_blocks, padded_rows) for the row grid.

    Targets ~target_block_bytes per block (so x+out double-buffered stays well
    under the 32 MiB scoped VMEM limit on all generations, incl. v7x's 64 MiB
    physical VMEM) while keeping at least a few grid steps so v7x's two
    TensorCores both get work.
    """
    tm_cap = max(8, (target_block_bytes // (n_feat * itemsize)) // 8 * 8)
    n_blocks = max(pl.cdiv(n_rows, tm_cap), min(min_grid, pl.cdiv(n_rows, 8)))
    tm = min(tm_cap, ((pl.cdiv(n_rows, n_blocks) + 7) // 8) * 8)
    n_blocks = pl.cdiv(n_rows, tm)
    return tm, n_blocks, tm * n_blocks


def pallas_layernorm(x2d, a_2, b_2, *, eps=1e-6, target_block_bytes=2 << 20):
    """x2d: (R, F); a_2/b_2: (F,).  Returns (R, F), same dtype as x2d."""
    R, F = x2d.shape
    assert F > 1, "unbiased std needs at least 2 features (divides by F-1)"
    # Note: F < 128 (d_model=80 here) means output stores are lane-masked; we
    # deliberately do NOT pad F to 128 because the wrapper-side pad+slice would
    # add more HBM traffic than the masked stores cost for a mem-bound kernel.

    itemsize = jnp.dtype(x2d.dtype).itemsize
    tm, n_blocks, r_pad = _choose_tiling(R, F, itemsize, target_block_bytes)

    a2 = a_2.astype(jnp.float32).reshape(1, F)
    b2 = b_2.astype(jnp.float32).reshape(1, F)
    xp = x2d if r_pad == R else jnp.pad(x2d, ((0, r_pad - R), (0, 0)))

    kernel = functools.partial(_layernorm_kernel, eps=eps, feat=F)
    y = pl.pallas_call(
        kernel,
        out_shape=jax.ShapeDtypeStruct((r_pad, F), x2d.dtype),
        grid_spec=pltpu.PrefetchScalarGridSpec(
            num_scalar_prefetch=0,
            grid=(n_blocks,),
            in_specs=[
                pl.BlockSpec((tm, F), lambda i: (i, 0)),
                pl.BlockSpec((1, F), lambda i: (0, 0)),
                pl.BlockSpec((1, F), lambda i: (0, 0)),
            ],
            out_specs=pl.BlockSpec((tm, F), lambda i: (i, 0)),
        ),
        compiler_params=pltpu.CompilerParams(
            dimension_semantics=("parallel",),
            vmem_limit_bytes=32 * 1024 * 1024,
        ),
    )(xp, a2, b2)
    return y if r_pad == R else y[:R]


class TCE:
    """JAX/Pallas port of the torch TCE module.

    layers: list of plain-JAX callables (the N deep-copied encoder layers).
    Norm params a_2 / b_2 are initialized exactly as in the torch LayerNorm
    (ones / zeros of shape (features,)).
    """

    def __init__(self, layer_fn, N, features, eps=1e-6):
        self.layers = [layer_fn for _ in range(N)]
        self.a_2 = jnp.ones((features,), dtype=jnp.float32)
        self.b_2 = jnp.zeros((features,), dtype=jnp.float32)
        self.eps = eps
        self.features = features

    def __call__(self, x):
        # x: (B, T, F)
        for layer in self.layers:
            x = layer(x)
        B, T, F = x.shape
        x2d = x.reshape(B * T, F)
        y2d = pallas_layernorm(x2d, self.a_2, self.b_2, eps=self.eps)
        return y2d.reshape(B, T, F)


def _reference_layernorm(x, a_2, b_2, eps=1e-6):
    # Two-pass reference matching the torch math exactly.
    mean = jnp.mean(x, axis=-1, keepdims=True)
    var = jnp.sum((x - mean) ** 2, axis=-1, keepdims=True) / (x.shape[-1] - 1)
    std = jnp.sqrt(var)
    return a_2 * (x - mean) / (std + eps) + b_2


if __name__ == "__main__":
    key = jax.random.PRNGKey(0)

    # Small shapes consistent with the module: d_model = 80 (the TCE hidden).
    B, T, F = 2, 8, 80
    N_LAYERS = 2                      # matches N=2 in BioSleepXSeq

    x = jax.random.normal(key, (B, T, F), dtype=jnp.float32)

    # TODO(synk): the injected EncoderLayer stack is represented by identity
    # callables here; only the LayerNorm hot path is a Pallas kernel.
    identity_layer = lambda t: t

    model = TCE(identity_layer, N_LAYERS, features=F)
    out = jax.block_until_ready(model(x))

    ref = _reference_layernorm(x, model.a_2, model.b_2, eps=model.eps)
    assert out.shape == (B, T, F)
    # Tolerance deliberately 1e-4: single-pass f32 variance vs two-pass ref.
    assert jnp.allclose(out, ref, atol=1e-4, rtol=1e-4), "mismatch vs reference"

    # Second (still small) shape exercising the cdiv-grid / row-padding path.
    key2 = jax.random.PRNGKey(1)
    x2 = jax.random.normal(key2, (4, 100, F), dtype=jnp.float32)
    out2 = jax.block_until_ready(model(x2))
    ref2 = _reference_layernorm(x2, model.a_2, model.b_2, eps=model.eps)
    assert out2.shape == x2.shape
    assert jnp.allclose(out2, ref2, atol=1e-4, rtol=1e-4), "mismatch (padded path)"

    print("KERNEL_OK")
</pallas_src>

<mosaic_0001>
module attributes {stable_mosaic.version = 11 : i64} {
  func.func @_layernorm_kernel(%arg0: i32, %arg1: memref<8x80xf32, #tpu.memory_space<vmem>>, %arg2: memref<1x80xf32, #tpu.memory_space<vmem>>, %arg3: memref<1x80xf32, #tpu.memory_space<vmem>>, %arg4: memref<8x80xf32, #tpu.memory_space<vmem>>) attributes {dimension_semantics = [#tpu.dimension_semantics<parallel>], iteration_bounds = array<i64: 2>, scalar_prefetch = 0 : i64, scratch_operands = 0 : i64, tpu.core_type = #tpu.core_type<tc>, window_params = [{transform_indices = @transform_0, window_bounds = array<i64: 8, 80>}, {pipeline_mode = #tpu.pipeline_mode<synchronous>, transform_indices = @transform_1, window_bounds = array<i64: 1, 80>}, {pipeline_mode = #tpu.pipeline_mode<synchronous>, transform_indices = @transform_2, window_bounds = array<i64: 1, 80>}, {transform_indices = @transform_3, window_bounds = array<i64: 8, 80>}]} {
    %c0 = arith.constant 0 : index
    %c0_0 = arith.constant 0 : index
    %0 = vector.load %arg1[%c0, %c0_0] : memref<8x80xf32, #tpu.memory_space<vmem>>, vector<8x80xf32>
    %cst = arith.constant dense<0.000000e+00> : vector<8xf32>
    %1 = vector.multi_reduction <add>, %0, %cst [1] : vector<8x80xf32> to vector<8xf32>
    %2 = vector.shape_cast %1 : vector<8xf32> to vector<8x1xf32>
    %3 = arith.mulf %0, %0 : vector<8x80xf32>
    %cst_1 = arith.constant dense<0.000000e+00> : vector<8xf32>
    %4 = vector.multi_reduction <add>, %3, %cst_1 [1] : vector<8x80xf32> to vector<8xf32>
    %5 = vector.shape_cast %4 : vector<8xf32> to vector<8x1xf32>
    %cst_2 = arith.constant 8.000000e+01 : f32
    %6 = vector.broadcast %cst_2 : f32 to vector<8x1xf32>
    %7 = arith.divf %2, %6 : vector<8x1xf32>
    %8 = arith.mulf %2, %7 : vector<8x1xf32>
    %9 = arith.subf %5, %8 : vector<8x1xf32>
    %cst_3 = arith.constant 7.900000e+01 : f32
    %10 = vector.broadcast %cst_3 : f32 to vector<8x1xf32>
    %11 = arith.divf %9, %10 : vector<8x1xf32>
    %cst_4 = arith.constant 0.000000e+00 : f32
    %12 = vector.broadcast %cst_4 : f32 to vector<8x1xf32>
    %13 = arith.maximumf %11, %12 : vector<8x1xf32>
    %14 = math.sqrt %13 : vector<8x1xf32>
    %cst_5 = arith.constant 9.99999997E-7 : f32
    %15 = vector.broadcast %cst_5 : f32 to vector<8x1xf32>
    %16 = arith.addf %14, %15 : vector<8x1xf32>
    %17 = tpu.reciprocal %16 : vector<8x1xf32> -> vector<8x1xf32>
    %18 = vector.broadcast %7 : vector<8x1xf32> to vector<8x80xf32>
    %19 = arith.subf %0, %18 : vector<8x80xf32>
    %20 = vector.broadcast %17 : vector<8x1xf32> to vector<8x80xf32>
    %21 = arith.mulf %19, %20 : vector<8x80xf32>
    %c0_6 = arith.constant 0 : index
    %c0_7 = arith.constant 0 : index
    %22 = vector.load %arg2[%c0_6, %c0_7] : memref<1x80xf32, #tpu.memory_space<vmem>>, vector<1x80xf32>
    %23 = vector.broadcast %22 : vector<1x80xf32> to vector<8x80xf32>
    %24 = arith.mulf %21, %23 : vector<8x80xf32>
    %c0_8 = arith.constant 0 : index
    %c0_9 = arith.constant 0 : index
    %25 = vector.load %arg3[%c0_8, %c0_9] : memref<1x80xf32, #tpu.memory_space<vmem>>, vector<1x80xf32>
    %26 = vector.broadcast %25 : vector<1x80xf32> to vector<8x80xf32>
    %27 = arith.addf %24, %26 : vector<8x80xf32>
    %c0_10 = arith.constant 0 : index
    %c0_11 = arith.constant 0 : index
    %28 = vector.load %arg4[%c0_10, %c0_11] : memref<8x80xf32, #tpu.memory_space<vmem>>, vector<8x80xf32>
    tpu.vector_store %arg4[%c0_10, %c0_11], %27 {strides = array<i32>} : memref<8x80xf32, #tpu.memory_space<vmem>>, vector<8x80xf32>,
    return
  }
  func.func @transform_0(%arg0: i32) -> (i32, i32) {
    %c0_i32 = arith.constant 0 : i32
    %c0_i32_0 = arith.constant 0 : i32
    return %arg0, %c0_i32 : i32, i32
  }
  func.func @transform_1(%arg0: i32) -> (i32, i32) {
    %c0_i32 = arith.constant 0 : i32
    %c0_i32_0 = arith.constant 0 : i32
    %c0_i32_1 = arith.constant 0 : i32
    return %c0_i32, %c0_i32_0 : i32, i32
  }
  func.func @transform_2(%arg0: i32) -> (i32, i32) {
    %c0_i32 = arith.constant 0 : i32
    %c0_i32_0 = arith.constant 0 : i32
    %c0_i32_1 = arith.constant 0 : i32
    return %c0_i32, %c0_i32_0 : i32, i32
  }
  func.func @transform_3(%arg0: i32) -> (i32, i32) {
    %c0_i32 = arith.constant 0 : i32
    %c0_i32_0 = arith.constant 0 : i32
    return %arg0, %c0_i32 : i32, i32
  }
}

</mosaic_0001>

<llo_original>
// kernel: tpu_custom_call.1
$region0: #{tpu_custom_call.1}
  #allocation0 [shape = 'u32[]', space=smem, size = 0x4, offset = 0x4, fixed_abs, tag = 'smem constant byte address 0x4 - core index']
  #allocation1 [shape = 'u32[72,128]{1,0:T(1,128)}', space=vmem, size = 0x9000, scoped, tag = 'internal scratch']
  %s0 = inlined_call_operand.hbm [shape: f32[16,80], index: 0, kind: input, shape index: {}]
  %s1 = inlined_call_operand.hbm [shape: f32[1,80], index: 1, kind: input, shape index: {}]
  %s2 = inlined_call_operand.vmem [shape: f32[1,80], index: 2, kind: input, shape index: {}]
  %s3 = inlined_call_operand.hbm [shape: f32[16,80], index: 3, kind: output, shape index: {}]
  %s4 = sld [smem:[#allocation0]]
  $region53: #{tpu_custom_call.1} parent=0
    _
  %s6 = ssub.s32 1, %s4
  %s7 = scalar_select 0, %s6, %s4
  $region1: #{tpu_custom_call.1} parent=0
    #allocation2 [shape = 'u8[8192]{0}', space=vmem, size = 0x2000, scoped, tag = 'input window, operand 0']
    #allocation3 [shape = 's32[2]{0}', space=sflag, size = 0x8, scoped, tag = 'scoped memory for tpu_custom_call.1']
    #allocation4 [shape = 's32[2]{0}', space=sflag, size = 0x8, scoped, tag = 'scoped memory for tpu_custom_call.1']
    #allocation5 [shape = 'u8[512]{0}', space=vmem, size = 0x400, scoped, tag = 'input window, operand 1, single buffered']
    #allocation6 [shape = 's32[1]{0}', space=sflag, size = 0x4, scoped, tag = 'scoped memory for tpu_custom_call.1']
    #allocation7 [shape = 'u8[8192]{0}', space=vmem, size = 0x2000, scoped, tag = 'output window, operand 0']
    %8 = vsyncpa [#allocation3], 0
    %s9 = scalar_lea.sflag [#allocation3], 1
    %10 = vsyncpa %s9, 0
    %11 = vsyncpa [#allocation6], 0
    %12 = vsyncpa [#allocation4], 0
    %s13 = scalar_lea.sflag [#allocation4], 1
    %14 = vsyncpa %s13, 0
    loop: start=0, step=1, limit=4
    $region2: #{tpu_custom_call.1} parent=1 // loop_pre_header
      _
    $region3: #{tpu_custom_call.1} parent=1 // loop_header
      %s16 = sphi 0, %s20
      %p17 = scmp.ge.s32.totalorder %s16, 4
      %s26 = sphi 0, %s28
      %s29 = sphi 0, %s26
      %s30 = sphi 0, %s29
      %s46 = sphi 0, %s30
      %s50 = sphi 0, %s50
      %s52 = sphi 0, %s50
      %s53 = sphi 0, %s52
      %s67 = sphi 0, %s53
      %s71 = sphi 0, %s71
      %s73 = sphi 0, %s71
      %s74 = sphi 0, %s73
      %s88 = sphi 0, %s74
      %s94 = sphi 0, %s96
      %s97 = sphi 0, %s94
      %s98 = sphi 0, %s97
      %s114 = sphi 0, %s98
    $region4: #{tpu_custom_call.1} parent=1 // loop_header_branch
      %19 = sbr.rel (%p17) target = $region8
    $region5: #{tpu_custom_call.1} parent=1 // loop_body
      %s21 = ssub.s32 %s16, 1
      %s22 = ssub.s32 %s16, 2
      %s23 = sadd.s32 %s16, 1
      %s24 = ssub.s32 %s16, %s23
      %p25 = scmp.eq.s32.totalorder %s24, 0
      %s27 = sadd.s32 %s26, 1
      %s28 = scalar_select %p25, %s26, %s27
      %p31 = pneg %p25
      %p32 = scmp.eq.s32.totalorder %s16, 1
      %p33 = por %p31, %p32
      %p34 = scmp.ne.s32.totalorder %s26, %s29
      %p35 = scmp.eq.s32.totalorder %s16, 0
      %p36 = por %p34, %p35
      %p37 = scmp.ne.s32.totalorder %s26, %s29
      %p38 = scmp.eq.s32.totalorder %s21, 1
      %p39 = por %p37, %p38
      %p40 = scmp.ne.s32.totalorder %s29, %s30
      %p41 = scmp.eq.s32.totalorder %s21, 0
      %p42 = por %p40, %p41
      %p43 = scmp.ne.s32.totalorder %s29, %s30
      %p44 = scmp.eq.s32.totalorder %s22, 1
      %p45 = por %p43, %p44
      %p47 = scmp.ne.s32.totalorder %s30, %s46
      %p48 = scmp.eq.s32.totalorder %s22, 0
      %p49 = por %p47, %p48
      %s51 = sadd.s32 %s50, 1
      %p54 = scmp.eq.s32.totalorder %s16, 1
      %p55 = scmp.ne.s32.totalorder %s50, %s52
      %p56 = scmp.eq.s32.totalorder %s16, 0
      %p57 = por %p55, %p56
      %p58 = scmp.ne.s32.totalorder %s50, %s52
      %p59 = scmp.eq.s32.totalorder %s21, 1
      %p60 = por %p58, %p59
      %p61 = scmp.ne.s32.totalorder %s52, %s53
      %p62 = scmp.eq.s32.totalorder %s21, 0
      %p63 = por %p61, %p62
      %p64 = scmp.ne.s32.totalorder %s52, %s53
      %p65 = scmp.eq.s32.totalorder %s22, 1
      %p66 = por %p64, %p65
      %p68 = scmp.ne.s32.totalorder %s53, %s67
      %p69 = scmp.eq.s32.totalorder %s22, 0
      %p70 = por %p68, %p69
      %s72 = sadd.s32 %s71, 1
      %p75 = scmp.eq.s32.totalorder %s16, 1
      %p76 = scmp.ne.s32.totalorder %s71, %s73
      %p77 = scmp.eq.s32.totalorder %s16, 0
      %p78 = por %p76, %p77
      %p79 = scmp.ne.s32.totalorder %s71, %s73
      %p80 = scmp.eq.s32.totalorder %s21, 1
      %p81 = por %p79, %p80
      %p82 = scmp.ne.s32.totalorder %s73, %s74
      %p83 = scmp.eq.s32.totalorder %s21, 0
      %p84 = por %p82, %p83
      %p85 = scmp.ne.s32.totalorder %s73, %s74
      %p86 = scmp.eq.s32.totalorder %s22, 1
      %p87 = por %p85, %p86
      %p89 = scmp.ne.s32.totalorder %s74, %s88
      %p90 = scmp.eq.s32.totalorder %s22, 0
      %p91 = por %p89, %p90
      %s92 = ssub.s32 %s16, %s23
      %p93 = scmp.eq.s32.totalorder %s92, 0
      %s95 = sadd.s32 %s94, 1
      %s96 = scalar_select %p93, %s94, %s95
      %p99 = pneg %p93
      %p100 = scmp.eq.s32.totalorder %s16, 1
      %p101 = por %p99, %p100
      %p102 = scmp.ne.s32.totalorder %s94, %s97
      %p103 = scmp.eq.s32.totalorder %s16, 0
      %p104 = por %p102, %p103
      %p105 = scmp.ne.s32.totalorder %s94, %s97
      %p106 = scmp.eq.s32.totalorder %s21, 1
      %p107 = por %p105, %p106
      %p108 = scmp.ne.s32.totalorder %s97, %s98
      %p109 = scmp.eq.s32.totalorder %s21, 0
      %p110 = por %p108, %p109
      %p111 = scmp.ne.s32.totalorder %s97, %s98
      %p112 = scmp.eq.s32.totalorder %s22, 1
      %p113 = por %p111, %p112
      %p115 = scmp.ne.s32.totalorder %s98, %s114
      %p116 = scmp.eq.s32.totalorder %s22, 0
      %p117 = por %p115, %p116
      %p118 = scmp.le.s32.totalorder 1, %s16
      %p119 = scmp.lt.s32.totalorder %s16, 3
      %p120 = pnand %p118, %p119
      %p121 = pneg %p120
      // Predicated region
      $region9: #{tpu_custom_call.1} parent=5 // pred_check
        _
      $region10: #{tpu_custom_call.1} parent=5 // pred_check_branch
        %123 = sbr.rel (%p120) target = $region12
      $region11: #{tpu_custom_call.1} parent=5 // pred_region
        %s124 = ssub.s32 %s16, 1
        // Predicated region
        $region13: #{tpu_custom_call.1} parent=11 // pred_check
          %p125 = pneg %p63
        $region14: #{tpu_custom_call.1} parent=11 // pred_check_branch
          %127 = sbr.rel (%p125) target = $region16
        $region15: #{tpu_custom_call.1} parent=11 // pred_region
          %129 = vsyncadd [#allocation6], 0
          %s131 = sshll.u32 %s1, 4
          %s132 = int_to_ptr.hbm [resolvable:$true] %s131
          %s133 = sshll.u32 [#allocation5], 4
          %s134 = int_to_ptr.vmem [resolvable:$true] %s133
          %136 = dma.hbm_to_vmem [thread:$0]  %s132, 16, %s134, [#allocation6]
        $region16: #{tpu_custom_call.1} parent=11 // pred_fallthru
          _
        // Predicated region
        $region17: #{tpu_custom_call.1} parent=11 // pred_check
          %p137 = pneg %p84
        $region18: #{tpu_custom_call.1} parent=11 // pred_check_branch
          %139 = sbr.rel (%p137) target = $region20
        $region19: #{tpu_custom_call.1} parent=11 // pred_region
          _
        $region20: #{tpu_custom_call.1} parent=11 // pred_fallthru
          _
      $region12: #{tpu_custom_call.1} parent=5 // pred_fallthru
        _
      %p140 = scmp.lt.s32.totalorder %s16, 2
      // Predicated region
      $region21: #{tpu_custom_call.1} parent=5 // pred_check
        %p141 = pneg %p140
      $region22: #{tpu_custom_call.1} parent=5 // pred_check_branch
        %143 = sbr.rel (%p141) target = $region24
      $region23: #{tpu_custom_call.1} parent=5 // pred_region
        // Predicated region
        $region25: #{tpu_custom_call.1} parent=23 // pred_check
          %p144 = pneg %p36
        $region26: #{tpu_custom_call.1} parent=23 // pred_check_branch
          %146 = sbr.rel (%p144) target = $region28
        $region27: #{tpu_custom_call.1} parent=23 // pred_region
          %s147 = sand.u32 %s26, 1
          %s148 = scalar_lea.sflag [#allocation3], %s147
          %s149 = sand.u32 %s26, 1
          %s150 = smul.addr %s149, 8
          %s151 = scalar_lea.vmem [#allocation2], %s150
          %153 = vsyncadd %s148, 0
          %s154 = smul.addr %s16, 8
          %s155 = scalar_lea.hbm %s0, %s154
          %s157 = sshll.u32 %s155, 4
          %s158 = int_to_ptr.hbm [resolvable:$true] %s157
          %s159 = sshll.u32 %s151, 4
          %s160 = int_to_ptr.vmem [resolvable:$true] %s159
          %162 = dma.hbm_to_vmem [thread:$0]  %s158, 128, %s160, %s148
        $region28: #{tpu_custom_call.1} parent=23 // pred_fallthru
          _
      $region24: #{tpu_custom_call.1} parent=5 // pred_fallthru
        _
      %p163 = scmp.le.s32.totalorder 1, %s16
      %p164 = scmp.lt.s32.totalorder %s16, 3
      %p165 = pnand %p163, %p164
      %p166 = pneg %p165
      // Predicated region
      $region29: #{tpu_custom_call.1} parent=5 // pred_check
        _
      $region30: #{tpu_custom_call.1} parent=5 // pred_check_branch
        %168 = sbr.rel (%p165) target = $region32
      $region31: #{tpu_custom_call.1} parent=5 // pred_region
        %s169 = ssub.s32 %s16, 1
        %s170 = sand.u32 %s29, 1
        %s171 = scalar_lea.sflag [#allocation3], %s170
        %s172 = sand.u32 %s29, 1
        %s173 = smul.addr %s172, 8
        %s174 = scalar_lea.vmem [#allocation2], %s173
        // Predicated region
        $region33: #{tpu_custom_call.1} parent=31 // pred_check
          %p175 = pneg %p42
        $region34: #{tpu_custom_call.1} parent=31 // pred_check_branch
          %177 = sbr.rel (%p175) target = $region36
        $region35: #{tpu_custom_call.1} parent=31 // pred_region
          %179 = dma.done %s171, 128
        $region36: #{tpu_custom_call.1} parent=31 // pred_fallthru
          _
        // Predicated region
        $region37: #{tpu_custom_call.1} parent=31 // pred_check
          %p180 = pneg %p63
        $region38: #{tpu_custom_call.1} parent=31 // pred_check_branch
          %182 = sbr.rel (%p180) target = $region40
        $region39: #{tpu_custom_call.1} parent=31 // pred_region
          %184 = dma.done [#allocation6], 16
        $region40: #{tpu_custom_call.1} parent=31 // pred_fallthru
          _
        %s185 = sand.u32 %s29, 1
        %s186 = scalar_lea.sflag [#allocation3], %s185
        %s187 = sand.u32 %s29, 1
        %s188 = smul.addr %s187, 8
        %s189 = scalar_lea.vmem [#allocation2], %s188
        %p190 = pneg %p42
        %p191 = pneg %p39
        %p192 = pneg %p63
        %p193 = pneg %p60
        %p194 = pneg %p84
        %p195 = pneg %p81
        %p196 = pneg %p110
        %p197 = pneg %p107
        %s198 = sand.u32 %s97, 1
        %s199 = scalar_lea.sflag [#allocation4], %s198
        %s200 = sand.u32 %s97, 1
        %s201 = smul.addr %s200, 8
        %s202 = scalar_lea.vmem [#allocation7], %s201
        %v203 = vld [vmem:[%s174] sm:$0xff]
        %vm204 = vcmask 654336
        %v205 = vsel %vm204, %v203, 0.0
        %206 = vadd.xlane.f32.xlu0 %v205
        %v207 = vpop.xlane.xlu0 %206
        %v208 = vmul.f32 %v203, %v203
        %v209 = vsel %vm204, %v208, 0.0
        %210 = vadd.xlane.f32.xlu0 %v209
        %v211 = vpop.xlane.xlu0 %210
        %v212 = vrcp.pop 80.0
        %v213 = vmul.f32 80.0, %v212
        %v214 = vsub.f32 1.0, %v213
        %v215 = vmul.f32 %v212, %v214
        %v216 = vadd.f32 %v212, %v215
        %vm217 = vweird.f32 %v212
        %v218 = vsel %vm217, %v212, %v216
        %v219 = vmul.f32 %v207, %v218
        %v220 = vmul.f32 %v207, %v219
        %v221 = vsub.f32 %v211, %v220
        %v222 = vrcp.pop 79.0
        %v223 = vmul.f32 79.0, %v222
        %v224 = vsub.f32 1.0, %v223
        %v225 = vmul.f32 %v222, %v224
        %v226 = vadd.f32 %v222, %v225
        %vm227 = vweird.f32 %v222
        %v228 = vsel %vm227, %v222, %v226
        %v229 = vmul.f32 %v221, %v228
        %v230 = vmax.f32 %v229, 0.0
        %v231 = vrsqrt.pop %v230
        %v232 = vmul.f32 %v231, %v230
        %v233 = vmul.f32 %v232, %v231
        %v234 = vmul.f32 0.5, %v233
        %v235 = vsub.f32 1.5, %v234
        %v236 = vmul.f32 %v231, %v235
        %v237 = vmul.f32 %v230, %v236
        %vm238 = vcmp.eq.f32.partialorder %v230, inf
        %v239 = vsel %vm238, %v230, %v237
        %vm240 = vcmp.eq.f32.partialorder %v230, 0.0
        %v241 = vand.u32 %v230, 2147483648
        %v242 = vsel %vm240, %v241, %v239
        %v243 = vadd.f32 %v242, 1e-06
        %v244 = vrcp.pop %v243
        %v245 = vmul.f32 %v243, %v244
        %v246 = vsub.f32 1.0, %v245
        %v247 = vmul.f32 %v244, %v246
        %v248 = vadd.f32 %v244, %v247
        %vm249 = vweird.f32 %v243
        %vm250 = vweird.f32 %v244
        %vm251 = vmor %vm249, %vm250
        %v252 = vsel %vm251, %v244, %v248
        %v253 = vand.u32 2147483647, %v243
        %vm254 = vcmp.eq.f32.partialorder %v253, 8.507059e+37
        %v255 = vand.u32 %v243, 2147483648
        %v256 = vor.u32 1.1754944e-38, %v255
        %v257 = vsel %vm254, %v256, %v252
        %v258 = vsub.f32 %v203, %v219
        %v259 = vmul.f32 %v258, %v257
        %v260 = vld [vmem:[#allocation5] sm:$0x1]
        %v262 = vperm.slane %v260, 0
        %v264 = vmul.f32 %v259, %v262
        %v265 = vld [vmem:[%s2] sm:$0x1]
        %v267 = vperm.slane %v265, 0
        %v269 = vadd.f32 %v264, %v267
        %270 = vst.msk [vmem:[%s202] sm:$0xff] %vm204, %v269
        %s271 = sand.u32 %s97, 1
        %s272 = scalar_lea.sflag [#allocation4], %s271
        %s273 = sand.u32 %s97, 1
        %s274 = smul.addr %s273, 8
        %s275 = scalar_lea.vmem [#allocation7], %s274
        // Predicated region
        $region41: #{tpu_custom_call.1} parent=31 // pred_check
          %p276 = pneg %p107
        $region42: #{tpu_custom_call.1} parent=31 // pred_check_branch
          %278 = sbr.rel (%p276) target = $region44
        $region43: #{tpu_custom_call.1} parent=31 // pred_region
          %280 = vsyncadd %s272, 0
          %s281 = smul.addr %s21, 8
          %s282 = scalar_lea.hbm %s3, %s281
          %s284 = sshll.u32 %s275, 4
          %s285 = int_to_ptr.vmem [resolvable:$true] %s284
          %s286 = sshll.u32 %s282, 4
          %s287 = int_to_ptr.hbm [resolvable:$true] %s286
          %289 = dma.vmem_to_hbm [thread:$0]  %s285, 128, %s287, %s272
        $region44: #{tpu_custom_call.1} parent=31 // pred_fallthru
          _
      $region32: #{tpu_custom_call.1} parent=5 // pred_fallthru
        _
      %p290 = scmp.le.s32.totalorder 2, %s16
      // Predicated region
      $region45: #{tpu_custom_call.1} parent=5 // pred_check
        %p291 = pneg %p290
      $region46: #{tpu_custom_call.1} parent=5 // pred_check_branch
        %293 = sbr.rel (%p291) target = $region48
      $region47: #{tpu_custom_call.1} parent=5 // pred_region
        %s294 = ssub.s32 %s16, 2
        // Predicated region
        $region49: #{tpu_custom_call.1} parent=47 // pred_check
          %p295 = pneg %p113
        $region50: #{tpu_custom_call.1} parent=47 // pred_check_branch
          %297 = sbr.rel (%p295) target = $region52
        $region51: #{tpu_custom_call.1} parent=47 // pred_region
          %s298 = sand.u32 %s98, 1
          %s299 = scalar_lea.sflag [#allocation4], %s298
          %s300 = sand.u32 %s98, 1
          %s301 = smul.addr %s300, 8
          %s302 = scalar_lea.vmem [#allocation7], %s301
          %304 = dma.done %s299, 128
        $region52: #{tpu_custom_call.1} parent=47 // pred_fallthru
          _
      $region48: #{tpu_custom_call.1} parent=5 // pred_fallthru
        _
    $region6: #{tpu_custom_call.1} parent=1 // loop_footer
      %s20 = sadd.s32 1, %s16
    $region7: #{tpu_custom_call.1} parent=1 // loop_footer_branch
      %15 = sbr.rel target = $region3
    $region8: #{tpu_custom_call.1} parent=1 // loop_exit
      _
    %305 = vsyncpa [#allocation3], 1
    %s306 = scalar_lea.sflag [#allocation3], 1
    %307 = vsyncpa %s306, 1
    %308 = vsyncpa [#allocation6], 1
    %309 = vsyncpa [#allocation4], 1
    %s310 = scalar_lea.sflag [#allocation4], 1
    %311 = vsyncpa %s310, 1

</llo_original>
